<compile_context>
chip_gen: v7x
topology: tpu7x:2x2x1
jax: 0.10.0
libtpu: 0.0.40
codegen_flags: <defaults>
</compile_context>

<pallas_src>
import jax
import jax.numpy as jnp
from jax.experimental import pallas as pl
from jax.experimental.pallas import tpu as pltpu

D = 32              # embedding dim (module default d=32)
H = 2 * D           # RNN input size == hidden size == 2d = 64
NVOCAB = 10         # embedding vocabulary (digits 0..9)
NCLASS = 10
NC_PAD = 128        # lane-dense padded output width


def _make_kernel(B, T):
    """Single grid-less kernel: gather precomputed input projections, run the
    tanh recurrence with h kept in vregs, emit relu+Linear per step."""

    def kernel(n1_ref, n2_ref, tbl_ref, whh_ref, wo_ref, bo_ref, out_ref):
        # ---- Gather precomputed input projections (f32, off the critical path).
        #  xp[t] (B, H) = x_t @ W_ih^T + b_ih + b_hh, looked up by (n1, n2).
        xp = []
        for t in range(T):                              # static unroll (tiny)
            rows = []
            for b in range(B):
                idx = n1_ref[b, t] * NVOCAB + n2_ref[b, t]    # SMEM scalars
                rows.append(tbl_ref[pl.ds(idx, 1), :])        # (1, H) dynamic row
            xp.append(jnp.concatenate(rows, axis=0))          # (B, H)

        whh = whh_ref[...]          # (H, H)   bf16  (W_hh^T)
        wo = wo_ref[...]            # (H, 128) bf16  (W_out^T, zero-padded lanes)
        bo = bo_ref[...]            # (1, 128) f32   (b_out,   zero-padded lanes)

        def emit(t, h):
            # relu -> bf16 for the MXU; bias-add stays f32.
            r = jnp.maximum(h, 0.0).astype(jnp.bfloat16)
            y = jnp.dot(r, wo, preferred_element_type=jnp.float32) + bo
            out_ref[:, t * NC_PAD:(t + 1) * NC_PAD] = y       # static lane slice

        # ---- Recurrence. t = 0 peeled: h_0 = 0 => no h @ W_hh matmul.
        h = jnp.tanh(xp[0])                                   # (B, H) f32
        emit(0, h)
        for t in range(1, T):                                 # static unroll
            h = jnp.tanh(xp[t] + jnp.dot(h.astype(jnp.bfloat16), whh,
                                         preferred_element_type=jnp.float32))
            emit(t, h)

    return kernel


@jax.jit
def model_forward(kparams, num1, num2):
    """num1, num2: (B, T) int32 digit indices. Returns (B, T, 10) float32."""
    B, T = num1.shape
    out = pl.pallas_call(
        _make_kernel(B, T),
        out_shape=jax.ShapeDtypeStruct((B, T * NC_PAD), jnp.float32),
        in_specs=[
            pl.BlockSpec(memory_space=pltpu.MemorySpace.SMEM),   # num1
            pl.BlockSpec(memory_space=pltpu.MemorySpace.SMEM),   # num2
            pl.BlockSpec(memory_space=pltpu.MemorySpace.VMEM),   # fused emb/W_ih table
            pl.BlockSpec(memory_space=pltpu.MemorySpace.VMEM),   # W_hh^T (bf16)
            pl.BlockSpec(memory_space=pltpu.MemorySpace.VMEM),   # W_out^T padded (bf16)
            pl.BlockSpec(memory_space=pltpu.MemorySpace.VMEM),   # b_out padded (f32)
        ],
        out_specs=pl.BlockSpec(memory_space=pltpu.MemorySpace.VMEM),
    )(num1, num2, kparams["xproj_tbl"], kparams["w_hh_t"],
      kparams["w_out_pad"], kparams["b_out_pad"])
    # Contiguous reshape + lane slice (fused by XLA); no transpose needed.
    return out.reshape(B, T, NC_PAD)[:, :, :NCLASS]


def prepare_kernel_params(params):
    """One-time weight prep: fuse emb + W_ih + both RNN biases into a lookup
    table, transpose/pad the remaining weights, cast MXU operands to bf16."""
    emb, w_ih = params["emb"], params["w_ih"]
    p1 = emb @ w_ih[:, :D].T                                  # (10, H): emb[n1] part
    p2 = emb @ w_ih[:, D:].T                                  # (10, H): emb[n2] part
    tbl = (p1[:, None, :] + p2[None, :, :]).reshape(NVOCAB * NVOCAB, H)
    tbl = tbl + (params["b_ih"] + params["b_hh"])[None, :]    # fold both biases in
    w_out_pad = jnp.zeros((H, NC_PAD), jnp.float32).at[:, :NCLASS].set(
        params["w_out"].T)
    b_out_pad = jnp.zeros((1, NC_PAD), jnp.float32).at[0, :NCLASS].set(
        params["b_out"])
    return {
        "xproj_tbl": tbl.astype(jnp.float32),                 # (100, H) f32
        "w_hh_t": params["w_hh"].T.astype(jnp.bfloat16),      # (H, H)   bf16
        "w_out_pad": w_out_pad.astype(jnp.bfloat16),          # (H, 128) bf16
        "b_out_pad": b_out_pad,                               # (1, 128) f32
    }


def init_params(key, d=D):
    h = 2 * d
    k = jax.random.split(key, 7)
    s = 1.0 / jnp.sqrt(jnp.float32(h))
    return {
        "emb":   jax.random.normal(k[0], (NVOCAB, d), jnp.float32),
        "w_ih":  jax.random.uniform(k[1], (h, h), jnp.float32, -s, s),
        "w_hh":  jax.random.uniform(k[2], (h, h), jnp.float32, -s, s),
        "b_ih":  jax.random.uniform(k[3], (h,), jnp.float32, -s, s),
        "b_hh":  jax.random.uniform(k[4], (h,), jnp.float32, -s, s),
        "w_out": jax.random.uniform(k[5], (NCLASS, h), jnp.float32, -s, s),
        "b_out": jax.random.uniform(k[6], (NCLASS,), jnp.float32, -s, s),
    }


def model_forward_ref(params, num1, num2):
    """Pure-JAX f32 reference of the same forward pass (sanity check)."""
    x = params["emb"][num1]
    y = params["emb"][num2]
    r = jnp.concatenate([x, y], axis=-1)                      # (B, T, H)
    B = r.shape[0]

    def step(h, x_t):
        h = jnp.tanh(x_t @ params["w_ih"].T + params["b_ih"]
                     + h @ params["w_hh"].T + params["b_hh"])
        return h, h

    h0 = jnp.zeros((B, H), jnp.float32)
    _, hs = jax.lax.scan(step, h0, jnp.transpose(r, (1, 0, 2)))   # (T, B, H)
    hs = jnp.transpose(hs, (1, 0, 2))                             # (B, T, H)
    hs = jnp.maximum(hs, 0.0)
    return hs @ params["w_out"].T + params["b_out"]


if __name__ == "__main__":
    key = jax.random.PRNGKey(0)
    p_key, k1, k2 = jax.random.split(key, 3)

    B, T = 2, 8
    params = init_params(p_key)
    kparams = prepare_kernel_params(params)                   # one-time weight prep
    num1 = jax.random.randint(k1, (B, T), 0, NVOCAB, dtype=jnp.int32)
    num2 = jax.random.randint(k2, (B, T), 0, NVOCAB, dtype=jnp.int32)

    out = jax.block_until_ready(model_forward(kparams, num1, num2))

    ref = model_forward_ref(params, num1, num2)
    assert out.shape == (B, T, NCLASS)
    # bf16 MXU operands are a deliberate precision trade (per perf review);
    # validate against the f32 reference with a correspondingly loose tolerance.
    assert jnp.allclose(out, ref, rtol=5e-2, atol=5e-2), \
        float(jnp.max(jnp.abs(out - ref)))

    print("KERNEL_OK")
</pallas_src>

<mosaic_0001>
module attributes {stable_mosaic.version = 11 : i64} {
  func.func @kernel(%arg0: memref<2x8xi32, #tpu.memory_space<smem>>, %arg1: memref<2x8xi32, #tpu.memory_space<smem>>, %arg2: memref<100x64xf32, #tpu.memory_space<vmem>>, %arg3: memref<64x64xbf16, #tpu.memory_space<vmem>>, %arg4: memref<64x128xbf16, #tpu.memory_space<vmem>>, %arg5: memref<1x128xf32, #tpu.memory_space<vmem>>, %arg6: memref<2x1024xf32, #tpu.memory_space<vmem>>) attributes {dimension_semantics = [], scalar_prefetch = 0 : i64, scratch_operands = 0 : i64, tpu.core_type = #tpu.core_type<tc>} {
    %c0 = arith.constant 0 : index
    %c0_0 = arith.constant 0 : index
    %0 = memref.load %arg0[%c0, %c0_0] : memref<2x8xi32, #tpu.memory_space<smem>>
    %c10_i32 = arith.constant 10 : i32
    %1 = arith.muli %0, %c10_i32 : i32
    %c0_1 = arith.constant 0 : index
    %c0_2 = arith.constant 0 : index
    %2 = memref.load %arg1[%c0_1, %c0_2] : memref<2x8xi32, #tpu.memory_space<smem>>
    %3 = arith.addi %1, %2 : i32
    %4 = arith.index_cast %3 : i32 to index
    %c0_3 = arith.constant 0 : index
    %5 = vector.load %arg2[%4, %c0_3] : memref<100x64xf32, #tpu.memory_space<vmem>>, vector<1x64xf32>
    %c1 = arith.constant 1 : index
    %c0_4 = arith.constant 0 : index
    %6 = memref.load %arg0[%c1, %c0_4] : memref<2x8xi32, #tpu.memory_space<smem>>
    %c10_i32_5 = arith.constant 10 : i32
    %7 = arith.muli %6, %c10_i32_5 : i32
    %c1_6 = arith.constant 1 : index
    %c0_7 = arith.constant 0 : index
    %8 = memref.load %arg1[%c1_6, %c0_7] : memref<2x8xi32, #tpu.memory_space<smem>>
    %9 = arith.addi %7, %8 : i32
    %10 = arith.index_cast %9 : i32 to index
    %c0_8 = arith.constant 0 : index
    %11 = vector.load %arg2[%10, %c0_8] : memref<100x64xf32, #tpu.memory_space<vmem>>, vector<1x64xf32>
    %12 = tpu.concatenate %5, %11 in 0 : vector<1x64xf32>, vector<1x64xf32> -> vector<2x64xf32>
    %c0_9 = arith.constant 0 : index
    %c1_10 = arith.constant 1 : index
    %13 = memref.load %arg0[%c0_9, %c1_10] : memref<2x8xi32, #tpu.memory_space<smem>>
    %c10_i32_11 = arith.constant 10 : i32
    %14 = arith.muli %13, %c10_i32_11 : i32
    %c0_12 = arith.constant 0 : index
    %c1_13 = arith.constant 1 : index
    %15 = memref.load %arg1[%c0_12, %c1_13] : memref<2x8xi32, #tpu.memory_space<smem>>
    %16 = arith.addi %14, %15 : i32
    %17 = arith.index_cast %16 : i32 to index
    %c0_14 = arith.constant 0 : index
    %18 = vector.load %arg2[%17, %c0_14] : memref<100x64xf32, #tpu.memory_space<vmem>>, vector<1x64xf32>
    %c1_15 = arith.constant 1 : index
    %c1_16 = arith.constant 1 : index
    %19 = memref.load %arg0[%c1_15, %c1_16] : memref<2x8xi32, #tpu.memory_space<smem>>
    %c10_i32_17 = arith.constant 10 : i32
    %20 = arith.muli %19, %c10_i32_17 : i32
    %c1_18 = arith.constant 1 : index
    %c1_19 = arith.constant 1 : index
    %21 = memref.load %arg1[%c1_18, %c1_19] : memref<2x8xi32, #tpu.memory_space<smem>>
    %22 = arith.addi %20, %21 : i32
    %23 = arith.index_cast %22 : i32 to index
    %c0_20 = arith.constant 0 : index
    %24 = vector.load %arg2[%23, %c0_20] : memref<100x64xf32, #tpu.memory_space<vmem>>, vector<1x64xf32>
    %25 = tpu.concatenate %18, %24 in 0 : vector<1x64xf32>, vector<1x64xf32> -> vector<2x64xf32>
    %c0_21 = arith.constant 0 : index
    %c2 = arith.constant 2 : index
    %26 = memref.load %arg0[%c0_21, %c2] : memref<2x8xi32, #tpu.memory_space<smem>>
    %c10_i32_22 = arith.constant 10 : i32
    %27 = arith.muli %26, %c10_i32_22 : i32
    %c0_23 = arith.constant 0 : index
    %c2_24 = arith.constant 2 : index
    %28 = memref.load %arg1[%c0_23, %c2_24] : memref<2x8xi32, #tpu.memory_space<smem>>
    %29 = arith.addi %27, %28 : i32
    %30 = arith.index_cast %29 : i32 to index
    %c0_25 = arith.constant 0 : index
    %31 = vector.load %arg2[%30, %c0_25] : memref<100x64xf32, #tpu.memory_space<vmem>>, vector<1x64xf32>
    %c1_26 = arith.constant 1 : index
    %c2_27 = arith.constant 2 : index
    %32 = memref.load %arg0[%c1_26, %c2_27] : memref<2x8xi32, #tpu.memory_space<smem>>
    %c10_i32_28 = arith.constant 10 : i32
    %33 = arith.muli %32, %c10_i32_28 : i32
    %c1_29 = arith.constant 1 : index
    %c2_30 = arith.constant 2 : index
    %34 = memref.load %arg1[%c1_29, %c2_30] : memref<2x8xi32, #tpu.memory_space<smem>>
    %35 = arith.addi %33, %34 : i32
    %36 = arith.index_cast %35 : i32 to index
    %c0_31 = arith.constant 0 : index
    %37 = vector.load %arg2[%36, %c0_31] : memref<100x64xf32, #tpu.memory_space<vmem>>, vector<1x64xf32>
    %38 = tpu.concatenate %31, %37 in 0 : vector<1x64xf32>, vector<1x64xf32> -> vector<2x64xf32>
    %c0_32 = arith.constant 0 : index
    %c3 = arith.constant 3 : index
    %39 = memref.load %arg0[%c0_32, %c3] : memref<2x8xi32, #tpu.memory_space<smem>>
    %c10_i32_33 = arith.constant 10 : i32
    %40 = arith.muli %39, %c10_i32_33 : i32
    %c0_34 = arith.constant 0 : index
    %c3_35 = arith.constant 3 : index
    %41 = memref.load %arg1[%c0_34, %c3_35] : memref<2x8xi32, #tpu.memory_space<smem>>
    %42 = arith.addi %40, %41 : i32
    %43 = arith.index_cast %42 : i32 to index
    %c0_36 = arith.constant 0 : index
    %44 = vector.load %arg2[%43, %c0_36] : memref<100x64xf32, #tpu.memory_space<vmem>>, vector<1x64xf32>
    %c1_37 = arith.constant 1 : index
    %c3_38 = arith.constant 3 : index
    %45 = memref.load %arg0[%c1_37, %c3_38] : memref<2x8xi32, #tpu.memory_space<smem>>
    %c10_i32_39 = arith.constant 10 : i32
    %46 = arith.muli %45, %c10_i32_39 : i32
    %c1_40 = arith.constant 1 : index
    %c3_41 = arith.constant 3 : index
    %47 = memref.load %arg1[%c1_40, %c3_41] : memref<2x8xi32, #tpu.memory_space<smem>>
    %48 = arith.addi %46, %47 : i32
    %49 = arith.index_cast %48 : i32 to index
    %c0_42 = arith.constant 0 : index
    %50 = vector.load %arg2[%49, %c0_42] : memref<100x64xf32, #tpu.memory_space<vmem>>, vector<1x64xf32>
    %51 = tpu.concatenate %44, %50 in 0 : vector<1x64xf32>, vector<1x64xf32> -> vector<2x64xf32>
    %c0_43 = arith.constant 0 : index
    %c4 = arith.constant 4 : index
    %52 = memref.load %arg0[%c0_43, %c4] : memref<2x8xi32, #tpu.memory_space<smem>>
    %c10_i32_44 = arith.constant 10 : i32
    %53 = arith.muli %52, %c10_i32_44 : i32
    %c0_45 = arith.constant 0 : index
    %c4_46 = arith.constant 4 : index
    %54 = memref.load %arg1[%c0_45, %c4_46] : memref<2x8xi32, #tpu.memory_space<smem>>
    %55 = arith.addi %53, %54 : i32
    %56 = arith.index_cast %55 : i32 to index
    %c0_47 = arith.constant 0 : index
    %57 = vector.load %arg2[%56, %c0_47] : memref<100x64xf32, #tpu.memory_space<vmem>>, vector<1x64xf32>
    %c1_48 = arith.constant 1 : index
    %c4_49 = arith.constant 4 : index
    %58 = memref.load %arg0[%c1_48, %c4_49] : memref<2x8xi32, #tpu.memory_space<smem>>
    %c10_i32_50 = arith.constant 10 : i32
    %59 = arith.muli %58, %c10_i32_50 : i32
    %c1_51 = arith.constant 1 : index
    %c4_52 = arith.constant 4 : index
    %60 = memref.load %arg1[%c1_51, %c4_52] : memref<2x8xi32, #tpu.memory_space<smem>>
    %61 = arith.addi %59, %60 : i32
    %62 = arith.index_cast %61 : i32 to index
    %c0_53 = arith.constant 0 : index
    %63 = vector.load %arg2[%62, %c0_53] : memref<100x64xf32, #tpu.memory_space<vmem>>, vector<1x64xf32>
    %64 = tpu.concatenate %57, %63 in 0 : vector<1x64xf32>, vector<1x64xf32> -> vector<2x64xf32>
    %c0_54 = arith.constant 0 : index
    %c5 = arith.constant 5 : index
    %65 = memref.load %arg0[%c0_54, %c5] : memref<2x8xi32, #tpu.memory_space<smem>>
    %c10_i32_55 = arith.constant 10 : i32
    %66 = arith.muli %65, %c10_i32_55 : i32
    %c0_56 = arith.constant 0 : index
    %c5_57 = arith.constant 5 : index
    %67 = memref.load %arg1[%c0_56, %c5_57] : memref<2x8xi32, #tpu.memory_space<smem>>
    %68 = arith.addi %66, %67 : i32
    %69 = arith.index_cast %68 : i32 to index
    %c0_58 = arith.constant 0 : index
    %70 = vector.load %arg2[%69, %c0_58] : memref<100x64xf32, #tpu.memory_space<vmem>>, vector<1x64xf32>
    %c1_59 = arith.constant 1 : index
    %c5_60 = arith.constant 5 : index
    %71 = memref.load %arg0[%c1_59, %c5_60] : memref<2x8xi32, #tpu.memory_space<smem>>
    %c10_i32_61 = arith.constant 10 : i32
    %72 = arith.muli %71, %c10_i32_61 : i32
    %c1_62 = arith.constant 1 : index
    %c5_63 = arith.constant 5 : index
    %73 = memref.load %arg1[%c1_62, %c5_63] : memref<2x8xi32, #tpu.memory_space<smem>>
    %74 = arith.addi %72, %73 : i32
    %75 = arith.index_cast %74 : i32 to index
    %c0_64 = arith.constant 0 : index
    %76 = vector.load %arg2[%75, %c0_64] : memref<100x64xf32, #tpu.memory_space<vmem>>, vector<1x64xf32>
    %77 = tpu.concatenate %70, %76 in 0 : vector<1x64xf32>, vector<1x64xf32> -> vector<2x64xf32>
    %c0_65 = arith.constant 0 : index
    %c6 = arith.constant 6 : index
    %78 = memref.load %arg0[%c0_65, %c6] : memref<2x8xi32, #tpu.memory_space<smem>>
    %c10_i32_66 = arith.constant 10 : i32
    %79 = arith.muli %78, %c10_i32_66 : i32
    %c0_67 = arith.constant 0 : index
    %c6_68 = arith.constant 6 : index
    %80 = memref.load %arg1[%c0_67, %c6_68] : memref<2x8xi32, #tpu.memory_space<smem>>
    %81 = arith.addi %79, %80 : i32
    %82 = arith.index_cast %81 : i32 to index
    %c0_69 = arith.constant 0 : index
    %83 = vector.load %arg2[%82, %c0_69] : memref<100x64xf32, #tpu.memory_space<vmem>>, vector<1x64xf32>
    %c1_70 = arith.constant 1 : index
    %c6_71 = arith.constant 6 : index
    %84 = memref.load %arg0[%c1_70, %c6_71] : memref<2x8xi32, #tpu.memory_space<smem>>
    %c10_i32_72 = arith.constant 10 : i32
    %85 = arith.muli %84, %c10_i32_72 : i32
    %c1_73 = arith.constant 1 : index
    %c6_74 = arith.constant 6 : index
    %86 = memref.load %arg1[%c1_73, %c6_74] : memref<2x8xi32, #tpu.memory_space<smem>>
    %87 = arith.addi %85, %86 : i32
    %88 = arith.index_cast %87 : i32 to index
    %c0_75 = arith.constant 0 : index
    %89 = vector.load %arg2[%88, %c0_75] : memref<100x64xf32, #tpu.memory_space<vmem>>, vector<1x64xf32>
    %90 = tpu.concatenate %83, %89 in 0 : vector<1x64xf32>, vector<1x64xf32> -> vector<2x64xf32>
    %c0_76 = arith.constant 0 : index
    %c7 = arith.constant 7 : index
    %91 = memref.load %arg0[%c0_76, %c7] : memref<2x8xi32, #tpu.memory_space<smem>>
    %c10_i32_77 = arith.constant 10 : i32
    %92 = arith.muli %91, %c10_i32_77 : i32
    %c0_78 = arith.constant 0 : index
    %c7_79 = arith.constant 7 : index
    %93 = memref.load %arg1[%c0_78, %c7_79] : memref<2x8xi32, #tpu.memory_space<smem>>
    %94 = arith.addi %92, %93 : i32
    %95 = arith.index_cast %94 : i32 to index
    %c0_80 = arith.constant 0 : index
    %96 = vector.load %arg2[%95, %c0_80] : memref<100x64xf32, #tpu.memory_space<vmem>>, vector<1x64xf32>
    %c1_81 = arith.constant 1 : index
    %c7_82 = arith.constant 7 : index
    %97 = memref.load %arg0[%c1_81, %c7_82] : memref<2x8xi32, #tpu.memory_space<smem>>
    %c10_i32_83 = arith.constant 10 : i32
    %98 = arith.muli %97, %c10_i32_83 : i32
    %c1_84 = arith.constant 1 : index
    %c7_85 = arith.constant 7 : index
    %99 = memref.load %arg1[%c1_84, %c7_85] : memref<2x8xi32, #tpu.memory_space<smem>>
    %100 = arith.addi %98, %99 : i32
    %101 = arith.index_cast %100 : i32 to index
    %c0_86 = arith.constant 0 : index
    %102 = vector.load %arg2[%101, %c0_86] : memref<100x64xf32, #tpu.memory_space<vmem>>, vector<1x64xf32>
    %103 = tpu.concatenate %96, %102 in 0 : vector<1x64xf32>, vector<1x64xf32> -> vector<2x64xf32>
    %c0_87 = arith.constant 0 : index
    %c0_88 = arith.constant 0 : index
    %104 = vector.load %arg3[%c0_87, %c0_88] : memref<64x64xbf16, #tpu.memory_space<vmem>>, vector<64x64xbf16>
    %c0_89 = arith.constant 0 : index
    %c0_90 = arith.constant 0 : index
    %105 = vector.load %arg4[%c0_89, %c0_90] : memref<64x128xbf16, #tpu.memory_space<vmem>>, vector<64x128xbf16>
    %c0_91 = arith.constant 0 : index
    %c0_92 = arith.constant 0 : index
    %106 = vector.load %arg5[%c0_91, %c0_92] : memref<1x128xf32, #tpu.memory_space<vmem>>, vector<1x128xf32>
    %107 = math.tanh %12 : vector<2x64xf32>
    %cst = arith.constant 0.000000e+00 : f32
    %108 = vector.broadcast %cst : f32 to vector<2x64xf32>
    %109 = arith.maximumf %107, %108 : vector<2x64xf32>
    %110 = arith.truncf %109 : vector<2x64xf32> to vector<2x64xbf16>
    %cst_93 = arith.constant dense<0.000000e+00> : vector<2x128xf32>
    %111 = tpu.matmul %110, %105, %cst_93 {dimension_numbers = #tpu.dot_dimension_numbers<[1], [0], [0], [1], [0, 0, 1, 1], [], []>} : vector<2x64xbf16>, vector<64x128xbf16>, vector<2x128xf32> -> vector<2x128xf32>
    %112 = vector.broadcast %106 : vector<1x128xf32> to vector<2x128xf32>
    %113 = arith.addf %111, %112 : vector<2x128xf32>
    %c0_94 = arith.constant 0 : index
    %c0_95 = arith.constant 0 : index
    %114 = vector.load %arg6[%c0_94, %c0_95] : memref<2x1024xf32, #tpu.memory_space<vmem>>, vector<2x128xf32>
    tpu.vector_store %arg6[%c0_94, %c0_95], %113 {strides = array<i32>} : memref<2x1024xf32, #tpu.memory_space<vmem>>, vector<2x128xf32>,
    %115 = arith.truncf %107 : vector<2x64xf32> to vector<2x64xbf16>
    %cst_96 = arith.constant dense<0.000000e+00> : vector<2x64xf32>
    %116 = tpu.matmul %115, %104, %cst_96 {dimension_numbers = #tpu.dot_dimension_numbers<[1], [0], [0], [1], [0, 0, 1, 1], [], []>} : vector<2x64xbf16>, vector<64x64xbf16>, vector<2x64xf32> -> vector<2x64xf32>
    %117 = arith.addf %25, %116 : vector<2x64xf32>
    %118 = math.tanh %117 : vector<2x64xf32>
    %cst_97 = arith.constant 0.000000e+00 : f32
    %119 = vector.broadcast %cst_97 : f32 to vector<2x64xf32>
    %120 = arith.maximumf %118, %119 : vector<2x64xf32>
    %121 = arith.truncf %120 : vector<2x64xf32> to vector<2x64xbf16>
    %cst_98 = arith.constant dense<0.000000e+00> : vector<2x128xf32>
    %122 = tpu.matmul %121, %105, %cst_98 {dimension_numbers = #tpu.dot_dimension_numbers<[1], [0], [0], [1], [0, 0, 1, 1], [], []>} : vector<2x64xbf16>, vector<64x128xbf16>, vector<2x128xf32> -> vector<2x128xf32>
    %123 = vector.broadcast %106 : vector<1x128xf32> to vector<2x128xf32>
    %124 = arith.addf %122, %123 : vector<2x128xf32>
    %c0_99 = arith.constant 0 : index
    %c128 = arith.constant 128 : index
    %125 = vector.load %arg6[%c0_99, %c128] : memref<2x1024xf32, #tpu.memory_space<vmem>>, vector<2x128xf32>
    tpu.vector_store %arg6[%c0_99, %c128], %124 {strides = array<i32>} : memref<2x1024xf32, #tpu.memory_space<vmem>>, vector<2x128xf32>,
    %126 = arith.truncf %118 : vector<2x64xf32> to vector<2x64xbf16>
    %cst_100 = arith.constant dense<0.000000e+00> : vector<2x64xf32>
    %127 = tpu.matmul %126, %104, %cst_100 {dimension_numbers = #tpu.dot_dimension_numbers<[1], [0], [0], [1], [0, 0, 1, 1], [], []>} : vector<2x64xbf16>, vector<64x64xbf16>, vector<2x64xf32> -> vector<2x64xf32>
    %128 = arith.addf %38, %127 : vector<2x64xf32>
    %129 = math.tanh %128 : vector<2x64xf32>
    %cst_101 = arith.constant 0.000000e+00 : f32
    %130 = vector.broadcast %cst_101 : f32 to vector<2x64xf32>
    %131 = arith.maximumf %129, %130 : vector<2x64xf32>
    %132 = arith.truncf %131 : vector<2x64xf32> to vector<2x64xbf16>
    %cst_102 = arith.constant dense<0.000000e+00> : vector<2x128xf32>
    %133 = tpu.matmul %132, %105, %cst_102 {dimension_numbers = #tpu.dot_dimension_numbers<[1], [0], [0], [1], [0, 0, 1, 1], [], []>} : vector<2x64xbf16>, vector<64x128xbf16>, vector<2x128xf32> -> vector<2x128xf32>
    %134 = vector.broadcast %106 : vector<1x128xf32> to vector<2x128xf32>
    %135 = arith.addf %133, %134 : vector<2x128xf32>
    %c0_103 = arith.constant 0 : index
    %c256 = arith.constant 256 : index
    %136 = vector.load %arg6[%c0_103, %c256] : memref<2x1024xf32, #tpu.memory_space<vmem>>, vector<2x128xf32>
    tpu.vector_store %arg6[%c0_103, %c256], %135 {strides = array<i32>} : memref<2x1024xf32, #tpu.memory_space<vmem>>, vector<2x128xf32>,
    %137 = arith.truncf %129 : vector<2x64xf32> to vector<2x64xbf16>
    %cst_104 = arith.constant dense<0.000000e+00> : vector<2x64xf32>
    %138 = tpu.matmul %137, %104, %cst_104 {dimension_numbers = #tpu.dot_dimension_numbers<[1], [0], [0], [1], [0, 0, 1, 1], [], []>} : vector<2x64xbf16>, vector<64x64xbf16>, vector<2x64xf32> -> vector<2x64xf32>
    %139 = arith.addf %51, %138 : vector<2x64xf32>
    %140 = math.tanh %139 : vector<2x64xf32>
    %cst_105 = arith.constant 0.000000e+00 : f32
    %141 = vector.broadcast %cst_105 : f32 to vector<2x64xf32>
    %142 = arith.maximumf %140, %141 : vector<2x64xf32>
    %143 = arith.truncf %142 : vector<2x64xf32> to vector<2x64xbf16>
    %cst_106 = arith.constant dense<0.000000e+00> : vector<2x128xf32>
    %144 = tpu.matmul %143, %105, %cst_106 {dimension_numbers = #tpu.dot_dimension_numbers<[1], [0], [0], [1], [0, 0, 1, 1], [], []>} : vector<2x64xbf16>, vector<64x128xbf16>, vector<2x128xf32> -> vector<2x128xf32>
    %145 = vector.broadcast %106 : vector<1x128xf32> to vector<2x128xf32>
    %146 = arith.addf %144, %145 : vector<2x128xf32>
    %c0_107 = arith.constant 0 : index
    %c384 = arith.constant 384 : index
    %147 = vector.load %arg6[%c0_107, %c384] : memref<2x1024xf32, #tpu.memory_space<vmem>>, vector<2x128xf32>
    tpu.vector_store %arg6[%c0_107, %c384], %146 {strides = array<i32>} : memref<2x1024xf32, #tpu.memory_space<vmem>>, vector<2x128xf32>,
    %148 = arith.truncf %140 : vector<2x64xf32> to vector<2x64xbf16>
    %cst_108 = arith.constant dense<0.000000e+00> : vector<2x64xf32>
    %149 = tpu.matmul %148, %104, %cst_108 {dimension_numbers = #tpu.dot_dimension_numbers<[1], [0], [0], [1], [0, 0, 1, 1], [], []>} : vector<2x64xbf16>, vector<64x64xbf16>, vector<2x64xf32> -> vector<2x64xf32>
    %150 = arith.addf %64, %149 : vector<2x64xf32>
    %151 = math.tanh %150 : vector<2x64xf32>
    %cst_109 = arith.constant 0.000000e+00 : f32
    %152 = vector.broadcast %cst_109 : f32 to vector<2x64xf32>
    %153 = arith.maximumf %151, %152 : vector<2x64xf32>
    %154 = arith.truncf %153 : vector<2x64xf32> to vector<2x64xbf16>
    %cst_110 = arith.constant dense<0.000000e+00> : vector<2x128xf32>
    %155 = tpu.matmul %154, %105, %cst_110 {dimension_numbers = #tpu.dot_dimension_numbers<[1], [0], [0], [1], [0, 0, 1, 1], [], []>} : vector<2x64xbf16>, vector<64x128xbf16>, vector<2x128xf32> -> vector<2x128xf32>
    %156 = vector.broadcast %106 : vector<1x128xf32> to vector<2x128xf32>
    %157 = arith.addf %155, %156 : vector<2x128xf32>
    %c0_111 = arith.constant 0 : index
    %c512 = arith.constant 512 : index
    %158 = vector.load %arg6[%c0_111, %c512] : memref<2x1024xf32, #tpu.memory_space<vmem>>, vector<2x128xf32>
    tpu.vector_store %arg6[%c0_111, %c512], %157 {strides = array<i32>} : memref<2x1024xf32, #tpu.memory_space<vmem>>, vector<2x128xf32>,
    %159 = arith.truncf %151 : vector<2x64xf32> to vector<2x64xbf16>
    %cst_112 = arith.constant dense<0.000000e+00> : vector<2x64xf32>
    %160 = tpu.matmul %159, %104, %cst_112 {dimension_numbers = #tpu.dot_dimension_numbers<[1], [0], [0], [1], [0, 0, 1, 1], [], []>} : vector<2x64xbf16>, vector<64x64xbf16>, vector<2x64xf32> -> vector<2x64xf32>
    %161 = arith.addf %77, %160 : vector<2x64xf32>
    %162 = math.tanh %161 : vector<2x64xf32>
    %cst_113 = arith.constant 0.000000e+00 : f32
    %163 = vector.broadcast %cst_113 : f32 to vector<2x64xf32>
    %164 = arith.maximumf %162, %163 : vector<2x64xf32>
    %165 = arith.truncf %164 : vector<2x64xf32> to vector<2x64xbf16>
    %cst_114 = arith.constant dense<0.000000e+00> : vector<2x128xf32>
    %166 = tpu.matmul %165, %105, %cst_114 {dimension_numbers = #tpu.dot_dimension_numbers<[1], [0], [0], [1], [0, 0, 1, 1], [], []>} : vector<2x64xbf16>, vector<64x128xbf16>, vector<2x128xf32> -> vector<2x128xf32>
    %167 = vector.broadcast %106 : vector<1x128xf32> to vector<2x128xf32>
    %168 = arith.addf %166, %167 : vector<2x128xf32>
    %c0_115 = arith.constant 0 : index
    %c640 = arith.constant 640 : index
    %169 = vector.load %arg6[%c0_115, %c640] : memref<2x1024xf32, #tpu.memory_space<vmem>>, vector<2x128xf32>
    tpu.vector_store %arg6[%c0_115, %c640], %168 {strides = array<i32>} : memref<2x1024xf32, #tpu.memory_space<vmem>>, vector<2x128xf32>,
    %170 = arith.truncf %162 : vector<2x64xf32> to vector<2x64xbf16>
    %cst_116 = arith.constant dense<0.000000e+00> : vector<2x64xf32>
    %171 = tpu.matmul %170, %104, %cst_116 {dimension_numbers = #tpu.dot_dimension_numbers<[1], [0], [0], [1], [0, 0, 1, 1], [], []>} : vector<2x64xbf16>, vector<64x64xbf16>, vector<2x64xf32> -> vector<2x64xf32>
    %172 = arith.addf %90, %171 : vector<2x64xf32>
    %173 = math.tanh %172 : vector<2x64xf32>
    %cst_117 = arith.constant 0.000000e+00 : f32
    %174 = vector.broadcast %cst_117 : f32 to vector<2x64xf32>
    %175 = arith.maximumf %173, %174 : vector<2x64xf32>
    %176 = arith.truncf %175 : vector<2x64xf32> to vector<2x64xbf16>
    %cst_118 = arith.constant dense<0.000000e+00> : vector<2x128xf32>
    %177 = tpu.matmul %176, %105, %cst_118 {dimension_numbers = #tpu.dot_dimension_numbers<[1], [0], [0], [1], [0, 0, 1, 1], [], []>} : vector<2x64xbf16>, vector<64x128xbf16>, vector<2x128xf32> -> vector<2x128xf32>
    %178 = vector.broadcast %106 : vector<1x128xf32> to vector<2x128xf32>
    %179 = arith.addf %177, %178 : vector<2x128xf32>
    %c0_119 = arith.constant 0 : index
    %c768 = arith.constant 768 : index
    %180 = vector.load %arg6[%c0_119, %c768] : memref<2x1024xf32, #tpu.memory_space<vmem>>, vector<2x128xf32>
    tpu.vector_store %arg6[%c0_119, %c768], %179 {strides = array<i32>} : memref<2x1024xf32, #tpu.memory_space<vmem>>, vector<2x128xf32>,
    %181 = arith.truncf %173 : vector<2x64xf32> to vector<2x64xbf16>
    %cst_120 = arith.constant dense<0.000000e+00> : vector<2x64xf32>
    %182 = tpu.matmul %181, %104, %cst_120 {dimension_numbers = #tpu.dot_dimension_numbers<[1], [0], [0], [1], [0, 0, 1, 1], [], []>} : vector<2x64xbf16>, vector<64x64xbf16>, vector<2x64xf32> -> vector<2x64xf32>
    %183 = arith.addf %103, %182 : vector<2x64xf32>
    %184 = math.tanh %183 : vector<2x64xf32>
    %cst_121 = arith.constant 0.000000e+00 : f32
    %185 = vector.broadcast %cst_121 : f32 to vector<2x64xf32>
    %186 = arith.maximumf %184, %185 : vector<2x64xf32>
    %187 = arith.truncf %186 : vector<2x64xf32> to vector<2x64xbf16>
    %cst_122 = arith.constant dense<0.000000e+00> : vector<2x128xf32>
    %188 = tpu.matmul %187, %105, %cst_122 {dimension_numbers = #tpu.dot_dimension_numbers<[1], [0], [0], [1], [0, 0, 1, 1], [], []>} : vector<2x64xbf16>, vector<64x128xbf16>, vector<2x128xf32> -> vector<2x128xf32>
    %189 = vector.broadcast %106 : vector<1x128xf32> to vector<2x128xf32>
    %190 = arith.addf %188, %189 : vector<2x128xf32>
    %c0_123 = arith.constant 0 : index
    %c896 = arith.constant 896 : index
    %191 = vector.load %arg6[%c0_123, %c896] : memref<2x1024xf32, #tpu.memory_space<vmem>>, vector<2x128xf32>
    tpu.vector_store %arg6[%c0_123, %c896], %190 {strides = array<i32>} : memref<2x1024xf32, #tpu.memory_space<vmem>>, vector<2x128xf32>,
    return
  }
}

</mosaic_0001>

<llo_original>
// kernel: model_forward.1
$region0: #{model_forward.1}
  #allocation0 [shape = 'u32[]', space=smem, size = 0x4, offset = 0x4, fixed_abs, tag = 'smem constant byte address 0x4 - core index']
  #allocation1 [shape = 'u32[144,128]{1,0:T(1,128)}', space=vmem, size = 0x12000, scoped, tag = 'internal scratch']
  %s0 = inlined_call_operand.vmem [shape: s32[2,8], index: 0, kind: input, shape index: {}]
  %s1 = inlined_call_operand.vmem [shape: s32[2,8], index: 1, kind: input, shape index: {}]
  %s2 = inlined_call_operand.vmem [shape: f32[100,64], index: 2, kind: input, shape index: {}]
  %s3 = inlined_call_operand.vmem [shape: bf16[64,64], index: 3, kind: input, shape index: {}]
  %s4 = inlined_call_operand.vmem [shape: bf16[64,128], index: 4, kind: input, shape index: {}]
  %s5 = inlined_call_operand.vmem [shape: f32[1,128], index: 5, kind: input, shape index: {}]
  %s6 = inlined_call_operand.vmem [shape: f32[2,1024], index: 6, kind: output, shape index: {}]
  %s7 = sld [smem:[#allocation0]]
  $region42: #{model_forward.1} parent=0
    _
  %s9 = ssub.s32 1, %s7
  %s10 = scalar_select 0, %s9, %s7
  $region1: #{model_forward.1} parent=0
    #allocation2 [shape = 'u8[1024]{0}', space=smem, size = 0x400, scoped, tag = 'input window, operand 0, single buffered']
    #allocation3 [shape = 's32[1]{0}', space=sflag, size = 0x4, scoped, tag = 'scoped memory for model_forward.1']
    #allocation4 [shape = 'u8[1024]{0}', space=smem, size = 0x400, scoped, tag = 'input window, operand 1, single buffered']
    #allocation5 [shape = 's32[1]{0}', space=sflag, size = 0x4, scoped, tag = 'scoped memory for model_forward.1']
    %11 = vsyncpa [#allocation3], 0
    %12 = vsyncpa [#allocation5], 0
    // Predicated region
    $region2: #{model_forward.1} parent=1 // pred_check
      _
    $region3: #{model_forward.1} parent=1 // pred_check_branch
      %14 = sbr.rel (0) target = $region5
    $region4: #{model_forward.1} parent=1 // pred_region
      %s16 = ssub.s32 32, 32
      %17 = vsyncadd [#allocation3], %s16
      %s19 = sshll.u32 %s0, 4
      %s20 = int_to_ptr.vmem [resolvable:$true] %s19
      %22 = dma.vmem_to_smem %s20, 32, [#allocation2], [#allocation3]
    $region5: #{model_forward.1} parent=1 // pred_fallthru
      _
    // Predicated region
    $region6: #{model_forward.1} parent=1 // pred_check
      _
    $region7: #{model_forward.1} parent=1 // pred_check_branch
      %24 = sbr.rel (0) target = $region9
    $region8: #{model_forward.1} parent=1 // pred_region
      %s26 = ssub.s32 32, 32
      %27 = vsyncadd [#allocation5], %s26
      %s29 = sshll.u32 %s1, 4
      %s30 = int_to_ptr.vmem [resolvable:$true] %s29
      %32 = dma.vmem_to_smem %s30, 32, [#allocation4], [#allocation5]
    $region9: #{model_forward.1} parent=1 // pred_fallthru
      _
    // Predicated region
    $region10: #{model_forward.1} parent=1 // pred_check
      _
    $region11: #{model_forward.1} parent=1 // pred_check_branch
      %34 = sbr.rel (0) target = $region13
    $region12: #{model_forward.1} parent=1 // pred_region
      _
    $region13: #{model_forward.1} parent=1 // pred_fallthru
      _
    // Predicated region
    $region14: #{model_forward.1} parent=1 // pred_check
      _
    $region15: #{model_forward.1} parent=1 // pred_check_branch
      %36 = sbr.rel (0) target = $region17
    $region16: #{model_forward.1} parent=1 // pred_region
      _
    $region17: #{model_forward.1} parent=1 // pred_fallthru
      _
    // Predicated region
    $region18: #{model_forward.1} parent=1 // pred_check
      _
    $region19: #{model_forward.1} parent=1 // pred_check_branch
      %38 = sbr.rel (0) target = $region21
    $region20: #{model_forward.1} parent=1 // pred_region
      _
    $region21: #{model_forward.1} parent=1 // pred_fallthru
      _
    // Predicated region
    $region22: #{model_forward.1} parent=1 // pred_check
      _
    $region23: #{model_forward.1} parent=1 // pred_check_branch
      %40 = sbr.rel (0) target = $region25
    $region24: #{model_forward.1} parent=1 // pred_region
      _
    $region25: #{model_forward.1} parent=1 // pred_fallthru
      _
    // Predicated region
    $region26: #{model_forward.1} parent=1 // pred_check
      _
    $region27: #{model_forward.1} parent=1 // pred_check_branch
      %42 = sbr.rel (0) target = $region29
    $region28: #{model_forward.1} parent=1 // pred_region
      %43 = dma.done [#allocation3], 32
    $region29: #{model_forward.1} parent=1 // pred_fallthru
      _
    // Predicated region
    $region30: #{model_forward.1} parent=1 // pred_check
      _
    $region31: #{model_forward.1} parent=1 // pred_check_branch
      %45 = sbr.rel (0) target = $region33
    $region32: #{model_forward.1} parent=1 // pred_region
      %46 = dma.done [#allocation5], 32
    $region33: #{model_forward.1} parent=1 // pred_fallthru
      _
    %47 = sfence
    %s49 = sld [smem:[#allocation2]]
    %s50 = smul.u32 %s49, 10
    %s51 = sld [smem:[#allocation4]]
    %s52 = sadd.s32 %s50, %s51
    %s53 = scalar_lea.vmem %s2, %s52
    %v54 = vld [vmem:[%s53] sm:$0x1]
    %s55 = sld [smem:[#allocation2 + $0x80]]
    %s56 = smul.u32 %s55, 10
    %s57 = sld [smem:[#allocation4 + $0x80]]
    %s58 = sadd.s32 %s56, %s57
    %s59 = scalar_lea.vmem %s2, %s58
    %v60 = vld [vmem:[%s59] sm:$0x1]
    %v62 = vrot.slane %v60, 7
    %vm64 = vcmask 1040384
    %v65 = vsel %vm64, %v54, %v62
    %s66 = sld [smem:[#allocation2 + $0x1]]
    %s67 = smul.u32 %s66, 10
    %s68 = sld [smem:[#allocation4 + $0x1]]
    %s69 = sadd.s32 %s67, %s68
    %s70 = scalar_lea.vmem %s2, %s69
    %v71 = vld [vmem:[%s70] sm:$0x1]
    %s72 = sld [smem:[#allocation2 + $0x81]]
    %s73 = smul.u32 %s72, 10
    %s74 = sld [smem:[#allocation4 + $0x81]]
    %s75 = sadd.s32 %s73, %s74
    %s76 = scalar_lea.vmem %s2, %s75
    %v77 = vld [vmem:[%s76] sm:$0x1]
    %v79 = vrot.slane %v77, 7
    %v81 = vsel %vm64, %v71, %v79
    %s82 = sld [smem:[#allocation2 + $0x2]]
    %s83 = smul.u32 %s82, 10
    %s84 = sld [smem:[#allocation4 + $0x2]]
    %s85 = sadd.s32 %s83, %s84
    %s86 = scalar_lea.vmem %s2, %s85
    %v87 = vld [vmem:[%s86] sm:$0x1]
    %s88 = sld [smem:[#allocation2 + $0x82]]
    %s89 = smul.u32 %s88, 10
    %s90 = sld [smem:[#allocation4 + $0x82]]
    %s91 = sadd.s32 %s89, %s90
    %s92 = scalar_lea.vmem %s2, %s91
    %v93 = vld [vmem:[%s92] sm:$0x1]
    %v95 = vrot.slane %v93, 7
    %v97 = vsel %vm64, %v87, %v95
    %s98 = sld [smem:[#allocation2 + $0x3]]
    %s99 = smul.u32 %s98, 10
    %s100 = sld [smem:[#allocation4 + $0x3]]
    %s101 = sadd.s32 %s99, %s100
    %s102 = scalar_lea.vmem %s2, %s101
    %v103 = vld [vmem:[%s102] sm:$0x1]
    %s104 = sld [smem:[#allocation2 + $0x83]]
    %s105 = smul.u32 %s104, 10
    %s106 = sld [smem:[#allocation4 + $0x83]]
    %s107 = sadd.s32 %s105, %s106
    %s108 = scalar_lea.vmem %s2, %s107
    %v109 = vld [vmem:[%s108] sm:$0x1]
    %v111 = vrot.slane %v109, 7
    %v113 = vsel %vm64, %v103, %v111
    %s114 = sld [smem:[#allocation2 + $0x4]]
    %s115 = smul.u32 %s114, 10
    %s116 = sld [smem:[#allocation4 + $0x4]]
    %s117 = sadd.s32 %s115, %s116
    %s118 = scalar_lea.vmem %s2, %s117
    %v119 = vld [vmem:[%s118] sm:$0x1]
    %s120 = sld [smem:[#allocation2 + $0x84]]
    %s121 = smul.u32 %s120, 10
    %s122 = sld [smem:[#allocation4 + $0x84]]
    %s123 = sadd.s32 %s121, %s122
    %s124 = scalar_lea.vmem %s2, %s123
    %v125 = vld [vmem:[%s124] sm:$0x1]
    %v127 = vrot.slane %v125, 7
    %v129 = vsel %vm64, %v119, %v127
    %s130 = sld [smem:[#allocation2 + $0x5]]
    %s131 = smul.u32 %s130, 10
    %s132 = sld [smem:[#allocation4 + $0x5]]
    %s133 = sadd.s32 %s131, %s132
    %s134 = scalar_lea.vmem %s2, %s133
    %v135 = vld [vmem:[%s134] sm:$0x1]
    %s136 = sld [smem:[#allocation2 + $0x85]]
    %s137 = smul.u32 %s136, 10
    %s138 = sld [smem:[#allocation4 + $0x85]]
    %s139 = sadd.s32 %s137, %s138
    %s140 = scalar_lea.vmem %s2, %s139
    %v141 = vld [vmem:[%s140] sm:$0x1]
    %v143 = vrot.slane %v141, 7
    %v145 = vsel %vm64, %v135, %v143
    %s146 = sld [smem:[#allocation2 + $0x6]]
    %s147 = smul.u32 %s146, 10
    %s148 = sld [smem:[#allocation4 + $0x6]]
    %s149 = sadd.s32 %s147, %s148
    %s150 = scalar_lea.vmem %s2, %s149
    %v151 = vld [vmem:[%s150] sm:$0x1]
    %s152 = sld [smem:[#allocation2 + $0x86]]
    %s153 = smul.u32 %s152, 10
    %s154 = sld [smem:[#allocation4 + $0x86]]
    %s155 = sadd.s32 %s153, %s154
    %s156 = scalar_lea.vmem %s2, %s155
    %v157 = vld [vmem:[%s156] sm:$0x1]
    %v159 = vrot.slane %v157, 7
    %v161 = vsel %vm64, %v151, %v159
    %s162 = sld [smem:[#allocation2 + $0x7]]
    %s163 = smul.u32 %s162, 10
    %s164 = sld [smem:[#allocation4 + $0x7]]
    %s165 = sadd.s32 %s163, %s164
    %s166 = scalar_lea.vmem %s2, %s165
    %v167 = vld [vmem:[%s166] sm:$0x1]
    %s168 = sld [smem:[#allocation2 + $0x87]]
    %s169 = smul.u32 %s168, 10
    %s170 = sld [smem:[#allocation4 + $0x87]]
    %s171 = sadd.s32 %s169, %s170
    %s172 = scalar_lea.vmem %s2, %s171
    %v173 = vld [vmem:[%s172] sm:$0x1]
    %v175 = vrot.slane %v173, 7
    %v177 = vsel %vm64, %v167, %v175
    %v178 = vld [vmem:[%s3] sm:$0xf]
    %v179 = vld [vmem:[%s3 + $0x4] sm:$0xf]
    %v180 = vld [vmem:[%s3 + $0x8] sm:$0xf]
    %v181 = vld [vmem:[%s3 + $0xc] sm:$0xf]
    %v182 = vld [vmem:[%s3 + $0x10] sm:$0xf]
    %v183 = vld [vmem:[%s3 + $0x14] sm:$0xf]
    %v184 = vld [vmem:[%s3 + $0x18] sm:$0xf]
    %v185 = vld [vmem:[%s3 + $0x1c] sm:$0xf]
    %v186 = vld [vmem:[%s4] sm:$0xf]
    %v187 = vld [vmem:[%s4 + $0x4] sm:$0xf]
    %v188 = vld [vmem:[%s4 + $0x8] sm:$0xf]
    %v189 = vld [vmem:[%s4 + $0xc] sm:$0xf]
    %v190 = vld [vmem:[%s4 + $0x10] sm:$0xf]
    %v191 = vld [vmem:[%s4 + $0x14] sm:$0xf]
    %v192 = vld [vmem:[%s4 + $0x18] sm:$0xf]
    %v193 = vld [vmem:[%s4 + $0x1c] sm:$0xf]
    %v194 = vld [vmem:[%s5] sm:$0x1]
    %v195 = vtanh.pop %v65
    %v196 = vmax.f32 %v195, 0.0
    %v197 = vpack.c.bf16 %v196, %v196
    %v199 = vlaneseq
    %v200 = vshrl.u32 %v199, 7
    %v201 = vsub.s32 0, %v200
    %v202 = vrot.slane %v194, %v201
    %v212 = vunpack.c.l.b16 %v186
    %v213 = vunpack.c.l.b16 %v187
    %v214 = vunpack.c.l.b16 %v188
    %v215 = vunpack.c.l.b16 %v189
    %v216 = vunpack.c.l.b16 %v190
    %v217 = vunpack.c.l.b16 %v191
    %v218 = vunpack.c.l.b16 %v192
    %v219 = vunpack.c.l.b16 %v193
    %v220 = vpack.c.b16 %v213, %v212
    %v221 = vpack.c.b16 %v215, %v214
    %v222 = vpack.c.b16 %v217, %v216
    %v223 = vpack.c.b16 %v219, %v218
    %vm228 = vcmask 523264
    %v230 = vsel %vm228, %v197, 0
    %232 = vmatprep.subr.bf16.mxu0 0
    %233 = vmatpush1.bf16.msra.mxu0 %v220
    %234 = vmatprep.subr.bf16.mxu0 0
    %235 = vmatpush1.bf16.msra.mxu0 %v221
    %236 = vmatprep.subr.bf16.mxu0 0
    %237 = vmatpush1.bf16.msra.mxu0 %v222
    %238 = vmatprep.subr.bf16.mxu0 0
    %239 = vmatpush1.bf16.msra.mxu0 %v223
    %240 = vmatprep.subr.bf16.mxu0 0
    %241 = vmatpush1.bf16.msra.mxu0 0
    %242 = vmatprep.subr.bf16.mxu0 0
    %243 = vmatpush1.bf16.msra.mxu0 0
    %244 = vmatprep.subr.bf16.mxu0 0
    %245 = vmatpush1.bf16.msra.mxu0 0
    %246 = vmatprep.subr.bf16.mxu0 0
    %247 = vmatpush1.bf16.msra.mxu0 0
    %248 = vmatprep.subr.bf16.mxu0 0
    %249 = vmatpush1.bf16.msra.mxu0 0
    %250 = vmatprep.subr.bf16.mxu0 0
    %251 = vmatpush1.bf16.msra.mxu0 0
    %252 = vmatprep.subr.bf16.mxu0 0
    %253 = vmatpush1.bf16.msra.mxu0 0
    %254 = vmatprep.subr.bf16.mxu0 0
    %255 = vmatpush1.bf16.msra.mxu0 0
    %256 = vmatprep.subr.bf16.mxu0 0
    %257 = vmatpush1.bf16.msra.mxu0 0
    %258 = vmatprep.subr.bf16.mxu0 0
    %259 = vmatpush1.bf16.msra.mxu0 0
    %260 = vmatprep.subr.bf16.mxu0 0
    %261 = vmatpush1.bf16.msra.mxu0 0
    %262 = vmatprep.subr.bf16.mxu0 0
    %263 = vmatpush1.bf16.msra.mxu0 0
    %264 = vmatprep.mubr.bf16.mxu0 0
    %265 = vmatmul.mubr.bf16.gmra.mrb[0].mxu0 %v230
    %v266 = vpop.f32.mrb[0].mxu0
    %v267 = vadd.f32 %v202, %v266
    %v268 = vpop.f32.mrb[0].mxu0
    %v269 = vpop.f32.mrb[0].mxu0
    %v270 = vpop.f32.mrb[0].mxu0
    %271 = vdwg.mxu0
    %272 = vst [vmem:[%s6] sm:$0x3] %v267
    %v273 = vpack.c.bf16 %v195, %v195
    %v282 = vunpack.c.l.b16 %v178
    %v283 = vunpack.c.l.b16 %v179
    %v284 = vunpack.c.l.b16 %v180
    %v285 = vunpack.c.l.b16 %v181
    %v286 = vunpack.c.l.b16 %v182
    %v287 = vunpack.c.l.b16 %v183
    %v288 = vunpack.c.l.b16 %v184
    %v289 = vunpack.c.l.b16 %v185
    %v290 = vpack.c.b16 %v283, %v282
    %v291 = vpack.c.b16 %v285, %v284
    %v292 = vpack.c.b16 %v287, %v286
    %v293 = vpack.c.b16 %v289, %v288
    %v299 = vsel %vm228, %v273, 0
    %301 = vmatprep.subr.bf16.mxu0 0
    %302 = vmatpush1.bf16.msra.mxu0 %v290
    %303 = vmatprep.subr.bf16.mxu0 0
    %304 = vmatpush1.bf16.msra.mxu0 %v291
    %305 = vmatprep.subr.bf16.mxu0 0
    %306 = vmatpush1.bf16.msra.mxu0 %v292
    %307 = vmatprep.subr.bf16.mxu0 0
    %308 = vmatpush1.bf16.msra.mxu0 %v293
    %309 = vmatprep.subr.bf16.mxu0 0
    %310 = vmatpush1.bf16.msra.mxu0 0
    %311 = vmatprep.subr.bf16.mxu0 0
    %312 = vmatpush1.bf16.msra.mxu0 0
    %313 = vmatprep.subr.bf16.mxu0 0
    %314 = vmatpush1.bf16.msra.mxu0 0
    %315 = vmatprep.subr.bf16.mxu0 0
    %316 = vmatpush1.bf16.msra.mxu0 0
    %317 = vmatprep.subr.bf16.mxu0 0
    %318 = vmatpush1.bf16.msra.mxu0 0
    %319 = vmatprep.subr.bf16.mxu0 0
    %320 = vmatpush1.bf16.msra.mxu0 0
    %321 = vmatprep.subr.bf16.mxu0 0
    %322 = vmatpush1.bf16.msra.mxu0 0
    %323 = vmatprep.subr.bf16.mxu0 0
    %324 = vmatpush1.bf16.msra.mxu0 0
    %325 = vmatprep.subr.bf16.mxu0 0
    %326 = vmatpush1.bf16.msra.mxu0 0
    %327 = vmatprep.subr.bf16.mxu0 0
    %328 = vmatpush1.bf16.msra.mxu0 0
    %329 = vmatprep.subr.bf16.mxu0 0
    %330 = vmatpush1.bf16.msra.mxu0 0
    %331 = vmatprep.subr.bf16.mxu0 0
    %332 = vmatpush1.bf16.msra.mxu0 0
    %333 = vmatprep.mubr.bf16.mxu0 0
    %334 = vmatmul.mubr.bf16.gmra.mrb[0].mxu0 %v299
    %v335 = vpop.f32.mrb[0].mxu0
    %v336 = vadd.f32 0.0, %v335
    %v337 = vpop.f32.mrb[0].mxu0
    %v338 = vpop.f32.mrb[0].mxu0
    %v339 = vpop.f32.mrb[0].mxu0
    %340 = vdwg.mxu0
    %v341 = vadd.f32 %v81, %v336
    %v342 = vtanh.pop %v341
    %v343 = vmax.f32 %v342, 0.0
    %v344 = vpack.c.bf16 %v343, %v343
    %v346 = vsel %vm228, %v344, 0
    %348 = vmatprep.subr.bf16.mxu0 0
    %349 = vmatpush1.bf16.msra.mxu0 %v220
    %350 = vmatprep.subr.bf16.mxu0 0
    %351 = vmatpush1.bf16.msra.mxu0 %v221
    %352 = vmatprep.subr.bf16.mxu0 0
    %353 = vmatpush1.bf16.msra.mxu0 %v222
    %354 = vmatprep.subr.bf16.mxu0 0
    %355 = vmatpush1.bf16.msra.mxu0 %v223
    %356 = vmatprep.subr.bf16.mxu0 0
    %357 = vmatpush1.bf16.msra.mxu0 0
    %358 = vmatprep.subr.bf16.mxu0 0
    %359 = vmatpush1.bf16.msra.mxu0 0
    %360 = vmatprep.subr.bf16.mxu0 0
    %361 = vmatpush1.bf16.msra.mxu0 0
    %362 = vmatprep.subr.bf16.mxu0 0
    %363 = vmatpush1.bf16.msra.mxu0 0
    %364 = vmatprep.subr.bf16.mxu0 0
    %365 = vmatpush1.bf16.msra.mxu0 0
    %366 = vmatprep.subr.bf16.mxu0 0
    %367 = vmatpush1.bf16.msra.mxu0 0
    %368 = vmatprep.subr.bf16.mxu0 0
    %369 = vmatpush1.bf16.msra.mxu0 0
    %370 = vmatprep.subr.bf16.mxu0 0
    %371 = vmatpush1.bf16.msra.mxu0 0
    %372 = vmatprep.subr.bf16.mxu0 0
    %373 = vmatpush1.bf16.msra.mxu0 0
    %374 = vmatprep.subr.bf16.mxu0 0
    %375 = vmatpush1.bf16.msra.mxu0 0
    %376 = vmatprep.subr.bf16.mxu0 0
    %377 = vmatpush1.bf16.msra.mxu0 0
    %378 = vmatprep.subr.bf16.mxu0 0
    %379 = vmatpush1.bf16.msra.mxu0 0
    %380 = vmatprep.mubr.bf16.mxu0 0
    %381 = vmatmul.mubr.bf16.gmra.mrb[0].mxu0 %v346
    %v382 = vpop.f32.mrb[0].mxu0
    %v383 = vadd.f32 %v202, %v382
    %v384 = vpop.f32.mrb[0].mxu0
    %v385 = vpop.f32.mrb[0].mxu0
    %v386 = vpop.f32.mrb[0].mxu0
    %387 = vdwg.mxu0
    %388 = vst [vmem:[%s6 + $0x2] sm:$0x3] %v383
    %v389 = vpack.c.bf16 %v342, %v342
    %v391 = vsel %vm228, %v389, 0
    %393 = vmatprep.subr.bf16.mxu0 0
    %394 = vmatpush1.bf16.msra.mxu0 %v290
    %395 = vmatprep.subr.bf16.mxu0 0
    %396 = vmatpush1.bf16.msra.mxu0 %v291
    %397 = vmatprep.subr.bf16.mxu0 0
    %398 = vmatpush1.bf16.msra.mxu0 %v292
    %399 = vmatprep.subr.bf16.mxu0 0
    %400 = vmatpush1.bf16.msra.mxu0 %v293
    %401 = vmatprep.subr.bf16.mxu0 0
    %402 = vmatpush1.bf16.msra.mxu0 0
    %403 = vmatprep.subr.bf16.mxu0 0
    %404 = vmatpush1.bf16.msra.mxu0 0
    %405 = vmatprep.subr.bf16.mxu0 0
    %406 = vmatpush1.bf16.msra.mxu0 0
    %407 = vmatprep.subr.bf16.mxu0 0
    %408 = vmatpush1.bf16.msra.mxu0 0
    %409 = vmatprep.subr.bf16.mxu0 0
    %410 = vmatpush1.bf16.msra.mxu0 0
    %411 = vmatprep.subr.bf16.mxu0 0
    %412 = vmatpush1.bf16.msra.mxu0 0
    %413 = vmatprep.subr.bf16.mxu0 0
    %414 = vmatpush1.bf16.msra.mxu0 0
    %415 = vmatprep.subr.bf16.mxu0 0
    %416 = vmatpush1.bf16.msra.mxu0 0
    %417 = vmatprep.subr.bf16.mxu0 0
    %418 = vmatpush1.bf16.msra.mxu0 0
    %419 = vmatprep.subr.bf16.mxu0 0
    %420 = vmatpush1.bf16.msra.mxu0 0
    %421 = vmatprep.subr.bf16.mxu0 0
    %422 = vmatpush1.bf16.msra.mxu0 0
    %423 = vmatprep.subr.bf16.mxu0 0
    %424 = vmatpush1.bf16.msra.mxu0 0
    %425 = vmatprep.mubr.bf16.mxu0 0
    %426 = vmatmul.mubr.bf16.gmra.mrb[0].mxu0 %v391
    %v427 = vpop.f32.mrb[0].mxu0
    %v428 = vadd.f32 0.0, %v427
    %v429 = vpop.f32.mrb[0].mxu0
    %v430 = vpop.f32.mrb[0].mxu0
    %v431 = vpop.f32.mrb[0].mxu0
    %432 = vdwg.mxu0
    %v433 = vadd.f32 %v97, %v428
    %v434 = vtanh.pop %v433
    %v435 = vmax.f32 %v434, 0.0
    %v436 = vpack.c.bf16 %v435, %v435
    %v438 = vsel %vm228, %v436, 0
    %440 = vmatprep.subr.bf16.mxu0 0
    %441 = vmatpush1.bf16.msra.mxu0 %v220
    %442 = vmatprep.subr.bf16.mxu0 0
    %443 = vmatpush1.bf16.msra.mxu0 %v221
    %444 = vmatprep.subr.bf16.mxu0 0
    %445 = vmatpush1.bf16.msra.mxu0 %v222
    %446 = vmatprep.subr.bf16.mxu0 0
    %447 = vmatpush1.bf16.msra.mxu0 %v223
    %448 = vmatprep.subr.bf16.mxu0 0
    %449 = vmatpush1.bf16.msra.mxu0 0
    %450 = vmatprep.subr.bf16.mxu0 0
    %451 = vmatpush1.bf16.msra.mxu0 0
    %452 = vmatprep.subr.bf16.mxu0 0
    %453 = vmatpush1.bf16.msra.mxu0 0
    %454 = vmatprep.subr.bf16.mxu0 0
    %455 = vmatpush1.bf16.msra.mxu0 0
    %456 = vmatprep.subr.bf16.mxu0 0
    %457 = vmatpush1.bf16.msra.mxu0 0
    %458 = vmatprep.subr.bf16.mxu0 0
    %459 = vmatpush1.bf16.msra.mxu0 0
    %460 = vmatprep.subr.bf16.mxu0 0
    %461 = vmatpush1.bf16.msra.mxu0 0
    %462 = vmatprep.subr.bf16.mxu0 0
    %463 = vmatpush1.bf16.msra.mxu0 0
    %464 = vmatprep.subr.bf16.mxu0 0
    %465 = vmatpush1.bf16.msra.mxu0 0
    %466 = vmatprep.subr.bf16.mxu0 0
    %467 = vmatpush1.bf16.msra.mxu0 0
    %468 = vmatprep.subr.bf16.mxu0 0
    %469 = vmatpush1.bf16.msra.mxu0 0
    %470 = vmatprep.subr.bf16.mxu0 0
    %471 = vmatpush1.bf16.msra.mxu0 0
    %472 = vmatprep.mubr.bf16.mxu0 0
    %473 = vmatmul.mubr.bf16.gmra.mrb[0].mxu0 %v438
    %v474 = vpop.f32.mrb[0].mxu0
    %v475 = vadd.f32 %v202, %v474
    %v476 = vpop.f32.mrb[0].mxu0
    %v477 = vpop.f32.mrb[0].mxu0
    %v478 = vpop.f32.mrb[0].mxu0
    %479 = vdwg.mxu0
    %480 = vst [vmem:[%s6 + $0x4] sm:$0x3] %v475
    %v481 = vpack.c.bf16 %v434, %v434
    %v483 = vsel %vm228, %v481, 0
    %485 = vmatprep.subr.bf16.mxu0 0
    %486 = vmatpush1.bf16.msra.mxu0 %v290
    %487 = vmatprep.subr.bf16.mxu0 0
    %488 = vmatpush1.bf16.msra.mxu0 %v291
    %489 = vmatprep.subr.bf16.mxu0 0
    %490 = vmatpush1.bf16.msra.mxu0 %v292
    %491 = vmatprep.subr.bf16.mxu0 0
    %492 = vmatpush1.bf16.msra.mxu0 %v293
    %493 = vmatprep.subr.bf16.mxu0 0
    %494 = vmatpush1.bf16.msra.mxu0 0
    %495 = vmatprep.subr.bf16.mxu0 0
    %496 = vmatpush1.bf16.msra.mxu0 0
    %497 = vmatprep.subr.bf16.mxu0 0
    %498 = vmatpush1.bf16.msra.mxu0 0
    %499 = vmatprep.subr.bf16.mxu0 0
    %500 = vmatpush1.bf16.msra.mxu0 0
    %501 = vmatprep.subr.bf16.mxu0 0
    %502 = vmatpush1.bf16.msra.mxu0 0
    %503 = vmatprep.subr.bf16.mxu0 0
    %504 = vmatpush1.bf16.msra.mxu0 0
    %505 = vmatprep.subr.bf16.mxu0 0
    %506 = vmatpush1.bf16.msra.mxu0 0
    %507 = vmatprep.subr.bf16.mxu0 0
    %508 = vmatpush1.bf16.msra.mxu0 0
    %509 = vmatprep.subr.bf16.mxu0 0
    %510 = vmatpush1.bf16.msra.mxu0 0
    %511 = vmatprep.subr.bf16.mxu0 0
    %512 = vmatpush1.bf16.msra.mxu0 0
    %513 = vmatprep.subr.bf16.mxu0 0
    %514 = vmatpush1.bf16.msra.mxu0 0
    %515 = vmatprep.subr.bf16.mxu0 0
    %516 = vmatpush1.bf16.msra.mxu0 0
    %517 = vmatprep.mubr.bf16.mxu0 0
    %518 = vmatmul.mubr.bf16.gmra.mrb[0].mxu0 %v483
    %v519 = vpop.f32.mrb[0].mxu0
    %v520 = vadd.f32 0.0, %v519
    %v521 = vpop.f32.mrb[0].mxu0
    %v522 = vpop.f32.mrb[0].mxu0
    %v523 = vpop.f32.mrb[0].mxu0
    %524 = vdwg.mxu0
    %v525 = vadd.f32 %v113, %v520
    %v526 = vtanh.pop %v525
    %v527 = vmax.f32 %v526, 0.0
    %v528 = vpack.c.bf16 %v527, %v527
    %v530 = vsel %vm228, %v528, 0
    %532 = vmatprep.subr.bf16.mxu0 0
    %533 = vmatpush1.bf16.msra.mxu0 %v220
    %534 = vmatprep.subr.bf16.mxu0 0
    %535 = vmatpush1.bf16.msra.mxu0 %v221
    %536 = vmatprep.subr.bf16.mxu0 0
    %537 = vmatpush1.bf16.msra.mxu0 %v222
    %538 = vmatprep.subr.bf16.mxu0 0
    %539 = vmatpush1.bf16.msra.mxu0 %v223
    %540 = vmatprep.subr.bf16.mxu0 0
    %541 = vmatpush1.bf16.msra.mxu0 0
    %542 = vmatprep.subr.bf16.mxu0 0
    %543 = vmatpush1.bf16.msra.mxu0 0
    %544 = vmatprep.subr.bf16.mxu0 0
    %545 = vmatpush1.bf16.msra.mxu0 0
    %546 = vmatprep.subr.bf16.mxu0 0
    %547 = vmatpush1.bf16.msra.mxu0 0
    %548 = vmatprep.subr.bf16.mxu0 0
    %549 = vmatpush1.bf16.msra.mxu0 0
    %550 = vmatprep.subr.bf16.mxu0 0
    %551 = vmatpush1.bf16.msra.mxu0 0
    %552 = vmatprep.subr.bf16.mxu0 0
    %553 = vmatpush1.bf16.msra.mxu0 0
    %554 = vmatprep.subr.bf16.mxu0 0
    %555 = vmatpush1.bf16.msra.mxu0 0
    %556 = vmatprep.subr.bf16.mxu0 0
    %557 = vmatpush1.bf16.msra.mxu0 0
    %558 = vmatprep.subr.bf16.mxu0 0
    %559 = vmatpush1.bf16.msra.mxu0 0
    %560 = vmatprep.subr.bf16.mxu0 0
    %561 = vmatpush1.bf16.msra.mxu0 0
    %562 = vmatprep.subr.bf16.mxu0 0
    %563 = vmatpush1.bf16.msra.mxu0 0
    %564 = vmatprep.mubr.bf16.mxu0 0
    %565 = vmatmul.mubr.bf16.gmra.mrb[0].mxu0 %v530
    %v566 = vpop.f32.mrb[0].mxu0
    %v567 = vadd.f32 %v202, %v566
    %v568 = vpop.f32.mrb[0].mxu0
    %v569 = vpop.f32.mrb[0].mxu0
    %v570 = vpop.f32.mrb[0].mxu0
    %571 = vdwg.mxu0
    %572 = vst [vmem:[%s6 + $0x6] sm:$0x3] %v567
    %v573 = vpack.c.bf16 %v526, %v526
    %v575 = vsel %vm228, %v573, 0
    %577 = vmatprep.subr.bf16.mxu0 0
    %578 = vmatpush1.bf16.msra.mxu0 %v290
    %579 = vmatprep.subr.bf16.mxu0 0
    %580 = vmatpush1.bf16.msra.mxu0 %v291
    %581 = vmatprep.subr.bf16.mxu0 0
    %582 = vmatpush1.bf16.msra.mxu0 %v292
    %583 = vmatprep.subr.bf16.mxu0 0
    %584 = vmatpush1.bf16.msra.mxu0 %v293
    %585 = vmatprep.subr.bf16.mxu0 0
    %586 = vmatpush1.bf16.msra.mxu0 0
    %587 = vmatprep.subr.bf16.mxu0 0
    %588 = vmatpush1.bf16.msra.mxu0 0
    %589 = vmatprep.subr.bf16.mxu0 0
    %590 = vmatpush1.bf16.msra.mxu0 0
    %591 = vmatprep.subr.bf16.mxu0 0
    %592 = vmatpush1.bf16.msra.mxu0 0
    %593 = vmatprep.subr.bf16.mxu0 0
    %594 = vmatpush1.bf16.msra.mxu0 0
    %595 = vmatprep.subr.bf16.mxu0 0
    %596 = vmatpush1.bf16.msra.mxu0 0
    %597 = vmatprep.subr.bf16.mxu0 0
    %598 = vmatpush1.bf16.msra.mxu0 0
    %599 = vmatprep.subr.bf16.mxu0 0
    %600 = vmatpush1.bf16.msra.mxu0 0
    %601 = vmatprep.subr.bf16.mxu0 0
    %602 = vmatpush1.bf16.msra.mxu0 0
    %603 = vmatprep.subr.bf16.mxu0 0
    %604 = vmatpush1.bf16.msra.mxu0 0
    %605 = vmatprep.subr.bf16.mxu0 0
    %606 = vmatpush1.bf16.msra.mxu0 0
    %607 = vmatprep.subr.bf16.mxu0 0
    %608 = vmatpush1.bf16.msra.mxu0 0
    %609 = vmatprep.mubr.bf16.mxu0 0
    %610 = vmatmul.mubr.bf16.gmra.mrb[0].mxu0 %v575
    %v611 = vpop.f32.mrb[0].mxu0
    %v612 = vadd.f32 0.0, %v611
    %v613 = vpop.f32.mrb[0].mxu0
    %v614 = vpop.f32.mrb[0].mxu0
    %v615 = vpop.f32.mrb[0].mxu0
    %616 = vdwg.mxu0
    %v617 = vadd.f32 %v129, %v612
    %v618 = vtanh.pop %v617
    %v619 = vmax.f32 %v618, 0.0
    %v620 = vpack.c.bf16 %v619, %v619
    %v622 = vsel %vm228, %v620, 0
    %624 = vmatprep.subr.bf16.mxu0 0
    %625 = vmatpush1.bf16.msra.mxu0 %v220
    %626 = vmatprep.subr.bf16.mxu0 0
    %627 = vmatpush1.bf16.msra.mxu0 %v221
    %628 = vmatprep.subr.bf16.mxu0 0
    %629 = vmatpush1.bf16.msra.mxu0 %v222
    %630 = vmatprep.subr.bf16.mxu0 0
    %631 = vmatpush1.bf16.msra.mxu0 %v223
    %632 = vmatprep.subr.bf16.mxu0 0
    %633 = vmatpush1.bf16.msra.mxu0 0
    %634 = vmatprep.subr.bf16.mxu0 0
    %635 = vmatpush1.bf16.msra.mxu0 0
    %636 = vmatprep.subr.bf16.mxu0 0
    %637 = vmatpush1.bf16.msra.mxu0 0
    %638 = vmatprep.subr.bf16.mxu0 0
    %639 = vmatpush1.bf16.msra.mxu0 0
    %640 = vmatprep.subr.bf16.mxu0 0
    %641 = vmatpush1.bf16.msra.mxu0 0
    %642 = vmatprep.subr.bf16.mxu0 0
    %643 = vmatpush1.bf16.msra.mxu0 0
    %644 = vmatprep.subr.bf16.mxu0 0
    %645 = vmatpush1.bf16.msra.mxu0 0
    %646 = vmatprep.subr.bf16.mxu0 0
    %647 = vmatpush1.bf16.msra.mxu0 0
    %648 = vmatprep.subr.bf16.mxu0 0
    %649 = vmatpush1.bf16.msra.mxu0 0
    %650 = vmatprep.subr.bf16.mxu0 0
    %651 = vmatpush1.bf16.msra.mxu0 0
    %652 = vmatprep.subr.bf16.mxu0 0
    %653 = vmatpush1.bf16.msra.mxu0 0
    %654 = vmatprep.subr.bf16.mxu0 0
    %655 = vmatpush1.bf16.msra.mxu0 0
    %656 = vmatprep.mubr.bf16.mxu0 0
    %657 = vmatmul.mubr.bf16.gmra.mrb[0].mxu0 %v622
    %v658 = vpop.f32.mrb[0].mxu0
    %v659 = vadd.f32 %v202, %v658
    %v660 = vpop.f32.mrb[0].mxu0
    %v661 = vpop.f32.mrb[0].mxu0
    %v662 = vpop.f32.mrb[0].mxu0
    %663 = vdwg.mxu0
    %664 = vst [vmem:[%s6 + $0x8] sm:$0x3] %v659
    %v665 = vpack.c.bf16 %v618, %v618
    %v667 = vsel %vm228, %v665, 0
    %669 = vmatprep.subr.bf16.mxu0 0
    %670 = vmatpush1.bf16.msra.mxu0 %v290
    %671 = vmatprep.subr.bf16.mxu0 0
    %672 = vmatpush1.bf16.msra.mxu0 %v291
    %673 = vmatprep.subr.bf16.mxu0 0
    %674 = vmatpush1.bf16.msra.mxu0 %v292
    %675 = vmatprep.subr.bf16.mxu0 0
    %676 = vmatpush1.bf16.msra.mxu0 %v293
    %677 = vmatprep.subr.bf16.mxu0 0
    %678 = vmatpush1.bf16.msra.mxu0 0
    %679 = vmatprep.subr.bf16.mxu0 0
    %680 = vmatpush1.bf16.msra.mxu0 0
    %681 = vmatprep.subr.bf16.mxu0 0
    %682 = vmatpush1.bf16.msra.mxu0 0
    %683 = vmatprep.subr.bf16.mxu0 0
    %684 = vmatpush1.bf16.msra.mxu0 0
    %685 = vmatprep.subr.bf16.mxu0 0
    %686 = vmatpush1.bf16.msra.mxu0 0
    %687 = vmatprep.subr.bf16.mxu0 0
    %688 = vmatpush1.bf16.msra.mxu0 0
    %689 = vmatprep.subr.bf16.mxu0 0
    %690 = vmatpush1.bf16.msra.mxu0 0
    %691 = vmatprep.subr.bf16.mxu0 0
    %692 = vmatpush1.bf16.msra.mxu0 0
    %693 = vmatprep.subr.bf16.mxu0 0
    %694 = vmatpush1.bf16.msra.mxu0 0
    %695 = vmatprep.subr.bf16.mxu0 0
    %696 = vmatpush1.bf16.msra.mxu0 0
    %697 = vmatprep.subr.bf16.mxu0 0
    %698 = vmatpush1.bf16.msra.mxu0 0
    %699 = vmatprep.subr.bf16.mxu0 0
    %700 = vmatpush1.bf16.msra.mxu0 0
    %701 = vmatprep.mubr.bf16.mxu0 0
    %702 = vmatmul.mubr.bf16.gmra.mrb[0].mxu0 %v667
    %v703 = vpop.f32.mrb[0].mxu0
    %v704 = vadd.f32 0.0, %v703
    %v705 = vpop.f32.mrb[0].mxu0
    %v706 = vpop.f32.mrb[0].mxu0
    %v707 = vpop.f32.mrb[0].mxu0
    %708 = vdwg.mxu0
    %v709 = vadd.f32 %v145, %v704
    %v710 = vtanh.pop %v709
    %v711 = vmax.f32 %v710, 0.0
    %v712 = vpack.c.bf16 %v711, %v711
    %v714 = vsel %vm228, %v712, 0
    %716 = vmatprep.subr.bf16.mxu0 0
    %717 = vmatpush1.bf16.msra.mxu0 %v220
    %718 = vmatprep.subr.bf16.mxu0 0
    %719 = vmatpush1.bf16.msra.mxu0 %v221
    %720 = vmatprep.subr.bf16.mxu0 0
    %721 = vmatpush1.bf16.msra.mxu0 %v222
    %722 = vmatprep.subr.bf16.mxu0 0
    %723 = vmatpush1.bf16.msra.mxu0 %v223
    %724 = vmatprep.subr.bf16.mxu0 0
    %725 = vmatpush1.bf16.msra.mxu0 0
    %726 = vmatprep.subr.bf16.mxu0 0
    %727 = vmatpush1.bf16.msra.mxu0 0
    %728 = vmatprep.subr.bf16.mxu0 0
    %729 = vmatpush1.bf16.msra.mxu0 0
    %730 = vmatprep.subr.bf16.mxu0 0
    %731 = vmatpush1.bf16.msra.mxu0 0
    %732 = vmatprep.subr.bf16.mxu0 0
    %733 = vmatpush1.bf16.msra.mxu0 0
    %734 = vmatprep.subr.bf16.mxu0 0
    %735 = vmatpush1.bf16.msra.mxu0 0
    %736 = vmatprep.subr.bf16.mxu0 0
    %737 = vmatpush1.bf16.msra.mxu0 0
    %738 = vmatprep.subr.bf16.mxu0 0
    %739 = vmatpush1.bf16.msra.mxu0 0
    %740 = vmatprep.subr.bf16.mxu0 0
    %741 = vmatpush1.bf16.msra.mxu0 0
    %742 = vmatprep.subr.bf16.mxu0 0
    %743 = vmatpush1.bf16.msra.mxu0 0
    %744 = vmatprep.subr.bf16.mxu0 0
    %745 = vmatpush1.bf16.msra.mxu0 0
    %746 = vmatprep.subr.bf16.mxu0 0
    %747 = vmatpush1.bf16.msra.mxu0 0
    %748 = vmatprep.mubr.bf16.mxu0 0
    %749 = vmatmul.mubr.bf16.gmra.mrb[0].mxu0 %v714
    %v750 = vpop.f32.mrb[0].mxu0
    %v751 = vadd.f32 %v202, %v750
    %v752 = vpop.f32.mrb[0].mxu0
    %v753 = vpop.f32.mrb[0].mxu0
    %v754 = vpop.f32.mrb[0].mxu0
    %755 = vdwg.mxu0
    %756 = vst [vmem:[%s6 + $0xa] sm:$0x3] %v751
    %v757 = vpack.c.bf16 %v710, %v710
    %v759 = vsel %vm228, %v757, 0
    %761 = vmatprep.subr.bf16.mxu0 0
    %762 = vmatpush1.bf16.msra.mxu0 %v290
    %763 = vmatprep.subr.bf16.mxu0 0
    %764 = vmatpush1.bf16.msra.mxu0 %v291
    %765 = vmatprep.subr.bf16.mxu0 0
    %766 = vmatpush1.bf16.msra.mxu0 %v292
    %767 = vmatprep.subr.bf16.mxu0 0
    %768 = vmatpush1.bf16.msra.mxu0 %v293
    %769 = vmatprep.subr.bf16.mxu0 0
    %770 = vmatpush1.bf16.msra.mxu0 0
    %771 = vmatprep.subr.bf16.mxu0 0
    %772 = vmatpush1.bf16.msra.mxu0 0
    %773 = vmatprep.subr.bf16.mxu0 0
    %774 = vmatpush1.bf16.msra.mxu0 0
    %775 = vmatprep.subr.bf16.mxu0 0
    %776 = vmatpush1.bf16.msra.mxu0 0
    %777 = vmatprep.subr.bf16.mxu0 0
    %778 = vmatpush1.bf16.msra.mxu0 0
    %779 = vmatprep.subr.bf16.mxu0 0
    %780 = vmatpush1.bf16.msra.mxu0 0
    %781 = vmatprep.subr.bf16.mxu0 0
    %782 = vmatpush1.bf16.msra.mxu0 0
    %783 = vmatprep.subr.bf16.mxu0 0
    %784 = vmatpush1.bf16.msra.mxu0 0
    %785 = vmatprep.subr.bf16.mxu0 0
    %786 = vmatpush1.bf16.msra.mxu0 0
    %787 = vmatprep.subr.bf16.mxu0 0
    %788 = vmatpush1.bf16.msra.mxu0 0
    %789 = vmatprep.subr.bf16.mxu0 0
    %790 = vmatpush1.bf16.msra.mxu0 0
    %791 = vmatprep.subr.bf16.mxu0 0
    %792 = vmatpush1.bf16.msra.mxu0 0
    %793 = vmatprep.mubr.bf16.mxu0 0
    %794 = vmatmul.mubr.bf16.gmra.mrb[0].mxu0 %v759
    %v795 = vpop.f32.mrb[0].mxu0
    %v796 = vadd.f32 0.0, %v795
    %v797 = vpop.f32.mrb[0].mxu0
    %v798 = vpop.f32.mrb[0].mxu0
    %v799 = vpop.f32.mrb[0].mxu0
    %800 = vdwg.mxu0
    %v801 = vadd.f32 %v161, %v796
    %v802 = vtanh.pop %v801
    %v803 = vmax.f32 %v802, 0.0
    %v804 = vpack.c.bf16 %v803, %v803
    %v806 = vsel %vm228, %v804, 0
    %808 = vmatprep.subr.bf16.mxu0 0
    %809 = vmatpush1.bf16.msra.mxu0 %v220
    %810 = vmatprep.subr.bf16.mxu0 0
    %811 = vmatpush1.bf16.msra.mxu0 %v221
    %812 = vmatprep.subr.bf16.mxu0 0
    %813 = vmatpush1.bf16.msra.mxu0 %v222
    %814 = vmatprep.subr.bf16.mxu0 0
    %815 = vmatpush1.bf16.msra.mxu0 %v223
    %816 = vmatprep.subr.bf16.mxu0 0
    %817 = vmatpush1.bf16.msra.mxu0 0
    %818 = vmatprep.subr.bf16.mxu0 0
    %819 = vmatpush1.bf16.msra.mxu0 0
    %820 = vmatprep.subr.bf16.mxu0 0
    %821 = vmatpush1.bf16.msra.mxu0 0
    %822 = vmatprep.subr.bf16.mxu0 0
    %823 = vmatpush1.bf16.msra.mxu0 0
    %824 = vmatprep.subr.bf16.mxu0 0
    %825 = vmatpush1.bf16.msra.mxu0 0
    %826 = vmatprep.subr.bf16.mxu0 0
    %827 = vmatpush1.bf16.msra.mxu0 0
    %828 = vmatprep.subr.bf16.mxu0 0
    %829 = vmatpush1.bf16.msra.mxu0 0
    %830 = vmatprep.subr.bf16.mxu0 0
    %831 = vmatpush1.bf16.msra.mxu0 0
    %832 = vmatprep.subr.bf16.mxu0 0
    %833 = vmatpush1.bf16.msra.mxu0 0
    %834 = vmatprep.subr.bf16.mxu0 0
    %835 = vmatpush1.bf16.msra.mxu0 0
    %836 = vmatprep.subr.bf16.mxu0 0
    %837 = vmatpush1.bf16.msra.mxu0 0
    %838 = vmatprep.subr.bf16.mxu0 0
    %839 = vmatpush1.bf16.msra.mxu0 0
    %840 = vmatprep.mubr.bf16.mxu0 0
    %841 = vmatmul.mubr.bf16.gmra.mrb[0].mxu0 %v806
    %v842 = vpop.f32.mrb[0].mxu0
    %v843 = vadd.f32 %v202, %v842
    %v844 = vpop.f32.mrb[0].mxu0
    %v845 = vpop.f32.mrb[0].mxu0
    %v846 = vpop.f32.mrb[0].mxu0
    %847 = vdwg.mxu0
    %848 = vst [vmem:[%s6 + $0xc] sm:$0x3] %v843
    %v849 = vpack.c.bf16 %v802, %v802
    %v851 = vsel %vm228, %v849, 0
    %853 = vmatprep.subr.bf16.mxu0 0
    %854 = vmatpush1.bf16.msra.mxu0 %v290
    %855 = vmatprep.subr.bf16.mxu0 0
    %856 = vmatpush1.bf16.msra.mxu0 %v291
    %857 = vmatprep.subr.bf16.mxu0 0
    %858 = vmatpush1.bf16.msra.mxu0 %v292
    %859 = vmatprep.subr.bf16.mxu0 0
    %860 = vmatpush1.bf16.msra.mxu0 %v293
    %861 = vmatprep.subr.bf16.mxu0 0
    %862 = vmatpush1.bf16.msra.mxu0 0
    %863 = vmatprep.subr.bf16.mxu0 0
    %864 = vmatpush1.bf16.msra.mxu0 0
    %865 = vmatprep.subr.bf16.mxu0 0
    %866 = vmatpush1.bf16.msra.mxu0 0
    %867 = vmatprep.subr.bf16.mxu0 0
    %868 = vmatpush1.bf16.msra.mxu0 0
    %869 = vmatprep.subr.bf16.mxu0 0
    %870 = vmatpush1.bf16.msra.mxu0 0
    %871 = vmatprep.subr.bf16.mxu0 0
    %872 = vmatpush1.bf16.msra.mxu0 0
    %873 = vmatprep.subr.bf16.mxu0 0
    %874 = vmatpush1.bf16.msra.mxu0 0
    %875 = vmatprep.subr.bf16.mxu0 0
    %876 = vmatpush1.bf16.msra.mxu0 0
    %877 = vmatprep.subr.bf16.mxu0 0
    %878 = vmatpush1.bf16.msra.mxu0 0
    %879 = vmatprep.subr.bf16.mxu0 0
    %880 = vmatpush1.bf16.msra.mxu0 0
    %881 = vmatprep.subr.bf16.mxu0 0
    %882 = vmatpush1.bf16.msra.mxu0 0
    %883 = vmatprep.subr.bf16.mxu0 0
    %884 = vmatpush1.bf16.msra.mxu0 0
    %885 = vmatprep.mubr.bf16.mxu0 0
    %886 = vmatmul.mubr.bf16.gmra.mrb[0].mxu0 %v851
    %v887 = vpop.f32.mrb[0].mxu0
    %v888 = vadd.f32 0.0, %v887
    %v889 = vpop.f32.mrb[0].mxu0
    %v890 = vpop.f32.mrb[0].mxu0
    %v891 = vpop.f32.mrb[0].mxu0
    %892 = vdwg.mxu0
    %v893 = vadd.f32 %v177, %v888
    %v894 = vtanh.pop %v893
    %v895 = vmax.f32 %v894, 0.0
    %v896 = vpack.c.bf16 %v895, %v895
    %v898 = vsel %vm228, %v896, 0
    %900 = vmatprep.subr.bf16.mxu0 0
    %901 = vmatpush1.bf16.msra.mxu0 %v220
    %902 = vmatprep.subr.bf16.mxu0 0
    %903 = vmatpush1.bf16.msra.mxu0 %v221
    %904 = vmatprep.subr.bf16.mxu0 0
    %905 = vmatpush1.bf16.msra.mxu0 %v222
    %906 = vmatprep.subr.bf16.mxu0 0
    %907 = vmatpush1.bf16.msra.mxu0 %v223
    %908 = vmatprep.subr.bf16.mxu0 0
    %909 = vmatpush1.bf16.msra.mxu0 0
    %910 = vmatprep.subr.bf16.mxu0 0
    %911 = vmatpush1.bf16.msra.mxu0 0
    %912 = vmatprep.subr.bf16.mxu0 0
    %913 = vmatpush1.bf16.msra.mxu0 0
    %914 = vmatprep.subr.bf16.mxu0 0
    %915 = vmatpush1.bf16.msra.mxu0 0
    %916 = vmatprep.subr.bf16.mxu0 0
    %917 = vmatpush1.bf16.msra.mxu0 0
    %918 = vmatprep.subr.bf16.mxu0 0
    %919 = vmatpush1.bf16.msra.mxu0 0
    %920 = vmatprep.subr.bf16.mxu0 0
    %921 = vmatpush1.bf16.msra.mxu0 0
    %922 = vmatprep.subr.bf16.mxu0 0
    %923 = vmatpush1.bf16.msra.mxu0 0
    %924 = vmatprep.subr.bf16.mxu0 0
    %925 = vmatpush1.bf16.msra.mxu0 0
    %926 = vmatprep.subr.bf16.mxu0 0
    %927 = vmatpush1.bf16.msra.mxu0 0
    %928 = vmatprep.subr.bf16.mxu0 0
    %929 = vmatpush1.bf16.msra.mxu0 0
    %930 = vmatprep.subr.bf16.mxu0 0
    %931 = vmatpush1.bf16.msra.mxu0 0
    %932 = vmatprep.mubr.bf16.mxu0 0
    %933 = vmatmul.mubr.bf16.gmra.mrb[0].mxu0 %v898
    %v934 = vpop.f32.mrb[0].mxu0
    %v935 = vadd.f32 %v202, %v934
    %v936 = vpop.f32.mrb[0].mxu0
    %v937 = vpop.f32.mrb[0].mxu0
    %v938 = vpop.f32.mrb[0].mxu0
    %939 = vdwg.mxu0
    %940 = vst [vmem:[%s6 + $0xe] sm:$0x3] %v935
    // Predicated region
    $region34: #{model_forward.1} parent=1 // pred_check
      _
    $region35: #{model_forward.1} parent=1 // pred_check_branch
      %942 = sbr.rel (0) target = $region37
    $region36: #{model_forward.1} parent=1 // pred_region
      _
    $region37: #{model_forward.1} parent=1 // pred_fallthru
      _
    // Predicated region
    $region38: #{model_forward.1} parent=1 // pred_check
      _
    $region39: #{model_forward.1} parent=1 // pred_check_branch
      %944 = sbr.rel (0) target = $region41
    $region40: #{model_forward.1} parent=1 // pred_region
      _
    $region41: #{model_forward.1} parent=1 // pred_fallthru
      _
    %945 = vsyncpa [#allocation3], 1
    %946 = vsyncpa [#allocation5], 1

</llo_original>
